<compile_context>
chip_gen: v7x
topology: tpu7x:2x2x1
jax: 0.10.0
libtpu: 0.0.40
codegen_flags: <defaults>
</compile_context>

<pallas_src>
import functools

import jax
import jax.numpy as jnp
from jax.experimental import pallas as pl
from jax.experimental.pallas import tpu as pltpu


def _round_up(x, m):
    return ((x + m - 1) // m) * m


# ----------------------------------------------------------------------------
# Generation-aware VMEM budgeting.
# ----------------------------------------------------------------------------
@functools.lru_cache(maxsize=1)
def _vmem_limits():
    """Returns (vmem_limit_bytes for CompilerParams, tiling budget bytes)."""
    phys = 64 * 1024 * 1024            # conservative fallback = v7x per-TC VMEM
    try:
        info = pltpu.get_tpu_info()
        cap = getattr(info, "vmem_capacity_bytes", None)
        if cap:
            phys = int(cap)
    except Exception:
        pass
    # Leave headroom for compiler-internal scratch / semaphores.
    limit = min(int(phys * 3 // 4), 112 * 1024 * 1024)
    budget = int(limit * 2 // 3)
    return limit, budget


_BUFFERED_STATE = {"ok": hasattr(pl, "Buffered")}


def _resident_spec(block_shape, index_map, buffered):
    """BlockSpec for a grid-constant operand (weight/bias)."""
    if buffered:
        # Constant index_map -> single buffer is enough; halves VMEM footprint.
        return pl.BlockSpec(block_shape, index_map, pipeline_mode=pl.Buffered(1))
    return pl.BlockSpec(block_shape, index_map)


# ----------------------------------------------------------------------------
# Kernel: one (TM, K) x (K, TN) tile matmul + bias, f32 accumulation.
# ----------------------------------------------------------------------------
def _linear_bias_kernel(x_ref, wt_ref, b_ref, o_ref):
    # x: (TM, K) activations; wt: (K, TN) compute-dtype weight (lane padded);
    # b: (1, TN) f32; o: (TM, H_out) with H_out <= TN.
    x = x_ref[...].astype(wt_ref.dtype)          # in-kernel cast: no extra HBM pass
    acc = jnp.dot(x, wt_ref[...], preferred_element_type=jnp.float32)
    acc = acc + b_ref[...]
    h = o_ref.shape[-1]
    o_ref[...] = acc[:, :h].astype(o_ref.dtype)


# ----------------------------------------------------------------------------
# Tiling heuristics.
# ----------------------------------------------------------------------------
def _choose_tm(M, K, Hp, x_item, o_item, avail):
    """Row tile for the weight-resident path; None => weight doesn't fit."""
    per_row = 2 * (K * x_item + Hp * o_item)     # double-buffered x + out tiles
    if avail < per_row * 8:
        return None
    fit = int(avail // per_row)
    if M <= min(fit, 512):
        return int(M)                            # one full-row tile (block == full dim)
    # MXU-aligned tile (256 => v6e/v7x 2x256^2; also /128 for v5e), capped at
    # 1024 and at ~M/2 so the grid keeps >=2 steps (v7x megacore sharding).
    tm = min(fit, 1024, _round_up(pl.cdiv(M, 2), 256))
    if tm >= 256:
        tm = (tm // 256) * 256
    else:
        align = 16 if x_item < 4 else 8          # bf16 sublane packing
        tm = max(align, (tm // align) * align)
    return int(tm)


# ----------------------------------------------------------------------------
# y[:, :h_out] = x2d @ wt_pad[:, :h_out] + b_pad[:, :h_out]
# ----------------------------------------------------------------------------
def _pallas_linear(x2d, wt_pad, b_pad, h_out, out_dtype, *, vmem_budget=None):
    """x2d: (M, K); wt_pad: (K, Hp) pre-transposed lane-padded; b_pad: (1, Hp) f32.

    Returns (M, h_out) in out_dtype.  f32 accumulation inside the kernel.
    """
    M, K = x2d.shape
    Hp = wt_pad.shape[-1]
    limit, budget = _vmem_limits()
    if vmem_budget is not None:
        budget = vmem_budget

    x_item = jnp.dtype(x2d.dtype).itemsize
    w_item = jnp.dtype(wt_pad.dtype).itemsize
    o_item = jnp.dtype(out_dtype).itemsize

    cost = pl.CostEstimate(
        flops=2 * M * K * Hp,
        transcendentals=0,
        bytes_accessed=(M * K * x_item + K * Hp * w_item + Hp * 4
                        + M * h_out * o_item))

    weight_bytes = K * Hp * w_item + Hp * 4      # single-buffered resident weight
    tm = _choose_tm(M, K, Hp, x_item, o_item, budget - weight_bytes)

    if tm is not None:
        # ---- Weight-resident path: tile rows only. ------------------------
        grid_m = pl.cdiv(M, tm)

        def run(buffered):
            return pl.pallas_call(
                _linear_bias_kernel,
                out_shape=jax.ShapeDtypeStruct((M, h_out), out_dtype),
                grid=(grid_m,),
                in_specs=[
                    pl.BlockSpec((tm, K), lambda i: (i, 0)),        # streamed rows
                    _resident_spec((K, Hp), lambda i: (0, 0), buffered),
                    _resident_spec((1, Hp), lambda i: (0, 0), buffered),
                ],
                out_specs=pl.BlockSpec((tm, h_out), lambda i: (i, 0)),
                compiler_params=pltpu.CompilerParams(
                    dimension_semantics=("parallel",),
                    vmem_limit_bytes=limit),
                cost_estimate=cost,
            )(x2d, wt_pad, b_pad)

        if _BUFFERED_STATE["ok"]:
            try:
                return run(True)
            except Exception:
                _BUFFERED_STATE["ok"] = False   # older JAX: no pipeline_mode
        return run(False)

    # ---- Fallback: weight too large for residency -> tile output columns. --
    # Lane-dense 128-aligned column tiles; no accumulator needed.
    tn = 128
    for cand in (512, 256, 128):
        if cand <= Hp and 2 * (K * cand * w_item + cand * 4) <= budget // 2:
            tn = cand
            break
    avail = budget - 2 * (K * tn * w_item + tn * 4)
    per_row = 2 * (K * x_item + tn * o_item)
    tm_n = max(8, min(int(max(avail, 0) // per_row), 1024, _round_up(M, 8)))
    if tm_n >= 256:
        tm_n = (tm_n // 256) * 256
    else:
        tm_n = max(8, (tm_n // 8) * 8)
    tm_n = min(tm_n, _round_up(M, 8))
    grid_m = pl.cdiv(M, tm_n)
    grid_n = pl.cdiv(h_out, tn)

    return pl.pallas_call(
        _linear_bias_kernel,
        out_shape=jax.ShapeDtypeStruct((M, h_out), out_dtype),
        grid=(grid_m, grid_n),
        in_specs=[
            pl.BlockSpec((tm_n, K), lambda i, j: (i, 0)),
            pl.BlockSpec((K, tn), lambda i, j: (0, j)),
            pl.BlockSpec((1, tn), lambda i, j: (0, j)),
        ],
        out_specs=pl.BlockSpec((tm_n, tn), lambda i, j: (i, j)),
        compiler_params=pltpu.CompilerParams(
            dimension_semantics=("parallel", "parallel"),
            vmem_limit_bytes=limit),
        cost_estimate=cost,
    )(x2d, wt_pad, b_pad)


# ----------------------------------------------------------------------------
# Parameters (mirror Bridge.__init__) — stored pre-transposed & lane-padded.
# ----------------------------------------------------------------------------
class BridgeParams:
    def __init__(self, rnn_type, hidden_size, bidirectional, key,
                 compute_dtype=jnp.float32, out_dtype=None):
        if rnn_type not in ("LSTM", "GRU"):
            raise ValueError("No Supporting.")
        self.rnn_type = rnn_type
        self.hidden_size = hidden_size
        self.bidirectional = bidirectional
        self.compute_dtype = compute_dtype
        self.out_dtype = compute_dtype if out_dtype is None else out_dtype

        enc_out = hidden_size * (2 if bidirectional else 1)
        self.enc_out = enc_out
        self.h_pad = _round_up(hidden_size, 128)   # lane-dense weight width
        ks = jax.random.split(key, 6)
        scale = 1.0 / float(enc_out) ** 0.5

        def mk(kw, kb):
            w = jax.random.uniform(kw, (hidden_size, enc_out),
                                   jnp.float32, -scale, scale)
            b = jax.random.uniform(kb, (hidden_size,),
                                   jnp.float32, -scale, scale)
            return w, b

        def pack(w, b):
            # (H, K) -> (K, Hp): transpose + zero lane-pad once at init time.
            wt = jnp.zeros((enc_out, self.h_pad), jnp.float32)
            wt = wt.at[:, :hidden_size].set(w.T).astype(compute_dtype)
            bp = jnp.zeros((1, self.h_pad), jnp.float32)
            bp = bp.at[0, :hidden_size].set(b)
            return wt, bp

        # Raw weights kept for reference checking.
        self.out_w, self.out_b_raw = mk(ks[0], ks[1])
        self.out_wt, self.out_b = pack(self.out_w, self.out_b_raw)

        self.hid_w, self.hid_b_raw = mk(ks[2], ks[3])
        self.hid_wt, self.hid_b = pack(self.hid_w, self.hid_b_raw)

        if rnn_type == "LSTM":
            self.cell_w, self.cell_b_raw = mk(ks[4], ks[5])
            self.cell_wt, self.cell_b = pack(self.cell_w, self.cell_b_raw)


# ----------------------------------------------------------------------------
# Forward pass (matches Bridge.forward semantics).
# ----------------------------------------------------------------------------
def bridge_forward(params, encoder_output, final_encoder_states):
    H = params.hidden_size
    odt = params.out_dtype

    # encoder_memory = encoder_output_projection(encoder_output)
    lead = encoder_output.shape[:-1]
    K = encoder_output.shape[-1]
    mem = _pallas_linear(encoder_output.reshape(-1, K),
                         params.out_wt, params.out_b, H, odt)
    encoder_memory = mem.reshape(*lead, H)

    if params.rnn_type == "LSTM":
        h, c = final_encoder_states
        if params.bidirectional:
            # chunk(2, dim=0) then cat(dim=2): (2L, B, H) -> (L, B, 2H)
            h = jnp.concatenate(jnp.split(h, 2, axis=0), axis=2)
            c = jnp.concatenate(jnp.split(c, 2, axis=0), axis=2)
        L, B, Kh = h.shape
        yh = _pallas_linear(h.reshape(L * B, Kh), params.hid_wt,
                            params.hid_b, H, odt)
        yc = _pallas_linear(c.reshape(L * B, Kh), params.cell_wt,
                            params.cell_b, H, odt)
        init_decoder_states = (yh.reshape(L, B, H), yc.reshape(L, B, H))
    else:  # GRU
        h = final_encoder_states
        if params.bidirectional:
            h = jnp.concatenate(jnp.split(h, 2, axis=0), axis=2)
        L, B, Kh = h.shape
        y = _pallas_linear(h.reshape(L * B, Kh), params.hid_wt,
                           params.hid_b, H, odt)
        init_decoder_states = y.reshape(L, B, H)

    return encoder_memory, init_decoder_states


# ----------------------------------------------------------------------------
# Self-test
# ----------------------------------------------------------------------------
if __name__ == "__main__":
    key = jax.random.PRNGKey(0)
    k_param, k_eo, k_h, k_c, k_param_g, k_hg, k_nt = jax.random.split(key, 7)

    hidden = 32
    bidirectional = True
    B, S, L = 2, 8, 1
    dirs = 2 if bidirectional else 1
    enc_out = hidden * dirs

    def ref_lin(x, w, b):
        return x @ w.T + b

    # ---- LSTM path (f32 compute, f32 out) -------------------------------
    params = BridgeParams("LSTM", hidden, bidirectional, k_param)
    encoder_output = jax.random.normal(k_eo, (B, S, enc_out), jnp.float32)
    final_h = jax.random.normal(k_h, (L * dirs, B, hidden), jnp.float32)
    final_c = jax.random.normal(k_c, (L * dirs, B, hidden), jnp.float32)

    encoder_memory, (init_h, init_c) = bridge_forward(
        params, encoder_output, (final_h, final_c))
    jax.block_until_ready((encoder_memory, init_h, init_c))

    ref_mem = ref_lin(encoder_output, params.out_w, params.out_b_raw)
    h_cat = jnp.concatenate(jnp.split(final_h, 2, axis=0), axis=2)
    c_cat = jnp.concatenate(jnp.split(final_c, 2, axis=0), axis=2)
    ref_h = ref_lin(h_cat, params.hid_w, params.hid_b_raw)
    ref_c = ref_lin(c_cat, params.cell_w, params.cell_b_raw)

    assert encoder_memory.shape == (B, S, hidden)
    assert init_h.shape == (L, B, hidden) and init_c.shape == (L, B, hidden)
    assert jnp.allclose(encoder_memory, ref_mem, atol=1e-5)
    assert jnp.allclose(init_h, ref_h, atol=1e-5)
    assert jnp.allclose(init_c, ref_c, atol=1e-5)

    # ---- GRU path (f32) --------------------------------------------------
    params_g = BridgeParams("GRU", hidden, bidirectional, k_param_g)
    final_hg = jax.random.normal(k_hg, (L * dirs, B, hidden), jnp.float32)
    mem_g, init_g = bridge_forward(params_g, encoder_output, final_hg)
    jax.block_until_ready((mem_g, init_g))

    ref_mem_g = ref_lin(encoder_output, params_g.out_w, params_g.out_b_raw)
    hg_cat = jnp.concatenate(jnp.split(final_hg, 2, axis=0), axis=2)
    ref_g = ref_lin(hg_cat, params_g.hid_w, params_g.hid_b_raw)
    assert mem_g.shape == (B, S, hidden)
    assert init_g.shape == (L, B, hidden)
    assert jnp.allclose(mem_g, ref_mem_g, atol=1e-5)
    assert jnp.allclose(init_g, ref_g, atol=1e-5)

    # ---- bf16 compute path (bf16 HBM writeback, f32 accumulation) --------
    params_bf = BridgeParams("GRU", hidden, bidirectional, k_param_g,
                             compute_dtype=jnp.bfloat16)
    mem_bf, init_bf = bridge_forward(params_bf, encoder_output, final_hg)
    jax.block_until_ready((mem_bf, init_bf))
    assert mem_bf.dtype == jnp.bfloat16
    assert jnp.allclose(mem_bf.astype(jnp.float32), ref_mem_g,
                        atol=1e-1, rtol=1e-1)

    # ---- forced N-tiling fallback (weight "too large" for the budget) ----
    Ht, Kt, Mt = 192, 384, 64
    kk = jax.random.split(k_nt, 3)
    w_t = jax.random.normal(kk[0], (Ht, Kt), jnp.float32) * 0.05
    b_t = jax.random.normal(kk[1], (Ht,), jnp.float32) * 0.05
    x_t = jax.random.normal(kk[2], (Mt, Kt), jnp.float32)
    Hp_t = _round_up(Ht, 128)
    wt_t = jnp.zeros((Kt, Hp_t), jnp.float32).at[:, :Ht].set(w_t.T)
    bp_t = jnp.zeros((1, Hp_t), jnp.float32).at[0, :Ht].set(b_t)
    y_t = _pallas_linear(x_t, wt_t, bp_t, Ht, jnp.float32,
                         vmem_budget=160 * 1024)   # forces the column-tiled path
    jax.block_until_ready(y_t)
    assert y_t.shape == (Mt, Ht)
    assert jnp.allclose(y_t, x_t @ w_t.T + b_t, atol=1e-3, rtol=1e-3)

    print("KERNEL_OK")
</pallas_src>

<mosaic_0001>
module attributes {stable_mosaic.version = 11 : i64} {
  func.func @_linear_bias_kernel(%arg0: i32, %arg1: memref<16x64xf32, #tpu.memory_space<vmem>>, %arg2: memref<64x128xf32, #tpu.memory_space<vmem>>, %arg3: memref<1x128xf32, #tpu.memory_space<vmem>>, %arg4: memref<16x32xf32, #tpu.memory_space<vmem>>) attributes {dimension_semantics = [#tpu.dimension_semantics<parallel>], iteration_bounds = array<i64: 1>, scalar_prefetch = 0 : i64, scratch_operands = 0 : i64, tpu.core_type = #tpu.core_type<tc>, window_params = [{transform_indices = @transform_0, window_bounds = array<i64: 16, 64>}, {pipeline_mode = #tpu.pipeline_mode<synchronous>, transform_indices = @transform_1, window_bounds = array<i64: 64, 128>}, {pipeline_mode = #tpu.pipeline_mode<synchronous>, transform_indices = @transform_2, window_bounds = array<i64: 1, 128>}, {transform_indices = @transform_3, window_bounds = array<i64: 16, 32>}]} {
    %c0 = arith.constant 0 : index
    %c0_0 = arith.constant 0 : index
    %0 = vector.load %arg1[%c0, %c0_0] : memref<16x64xf32, #tpu.memory_space<vmem>>, vector<16x64xf32>
    %c0_1 = arith.constant 0 : index
    %c0_2 = arith.constant 0 : index
    %1 = vector.load %arg2[%c0_1, %c0_2] : memref<64x128xf32, #tpu.memory_space<vmem>>, vector<64x128xf32>
    %cst = arith.constant dense<0.000000e+00> : vector<16x128xf32>
    %2 = tpu.matmul %0, %1, %cst {dimension_numbers = #tpu.dot_dimension_numbers<[1], [0], [0], [1], [0, 0, 1, 1], [], []>} : vector<16x64xf32>, vector<64x128xf32>, vector<16x128xf32> -> vector<16x128xf32>
    %c0_3 = arith.constant 0 : index
    %c0_4 = arith.constant 0 : index
    %3 = vector.load %arg3[%c0_3, %c0_4] : memref<1x128xf32, #tpu.memory_space<vmem>>, vector<1x128xf32>
    %4 = vector.broadcast %3 : vector<1x128xf32> to vector<16x128xf32>
    %5 = arith.addf %2, %4 : vector<16x128xf32>
    %6 = vector.extract_strided_slice %5 {offsets = [0, 0], sizes = [16, 32], strides = [1, 1]} : vector<16x128xf32> to vector<16x32xf32>
    %c0_5 = arith.constant 0 : index
    %c0_6 = arith.constant 0 : index
    %7 = vector.load %arg4[%c0_5, %c0_6] : memref<16x32xf32, #tpu.memory_space<vmem>>, vector<16x32xf32>
    tpu.vector_store %arg4[%c0_5, %c0_6], %6 {strides = array<i32>} : memref<16x32xf32, #tpu.memory_space<vmem>>, vector<16x32xf32>,
    return
  }
  func.func @transform_0(%arg0: i32) -> (i32, i32) {
    %c0_i32 = arith.constant 0 : i32
    %c0_i32_0 = arith.constant 0 : i32
    return %arg0, %c0_i32 : i32, i32
  }
  func.func @transform_1(%arg0: i32) -> (i32, i32) {
    %c0_i32 = arith.constant 0 : i32
    %c0_i32_0 = arith.constant 0 : i32
    %c0_i32_1 = arith.constant 0 : i32
    return %c0_i32, %c0_i32_0 : i32, i32
  }
  func.func @transform_2(%arg0: i32) -> (i32, i32) {
    %c0_i32 = arith.constant 0 : i32
    %c0_i32_0 = arith.constant 0 : i32
    %c0_i32_1 = arith.constant 0 : i32
    return %c0_i32, %c0_i32_0 : i32, i32
  }
  func.func @transform_3(%arg0: i32) -> (i32, i32) {
    %c0_i32 = arith.constant 0 : i32
    %c0_i32_0 = arith.constant 0 : i32
    return %arg0, %c0_i32 : i32, i32
  }
}

module attributes {stable_mosaic.version = 11 : i64} {
  func.func @_linear_bias_kernel(%arg0: i32, %arg1: memref<16x64xf32, #tpu.memory_space<vmem>>, %arg2: memref<64x128xf32, #tpu.memory_space<vmem>>, %arg3: memref<1x128xf32, #tpu.memory_space<vmem>>, %arg4: memref<16x32xf32, #tpu.memory_space<vmem>>) attributes {dimension_semantics = [#tpu.dimension_semantics<parallel>], iteration_bounds = array<i64: 1>, scalar_prefetch = 0 : i64, scratch_operands = 0 : i64, tpu.core_type = #tpu.core_type<tc>, window_params = [{transform_indices = @transform_0, window_bounds = array<i64: 16, 64>}, {pipeline_mode = #tpu.pipeline_mode<synchronous>, transform_indices = @transform_1, window_bounds = array<i64: 64, 128>}, {pipeline_mode = #tpu.pipeline_mode<synchronous>, transform_indices = @transform_2, window_bounds = array<i64: 1, 128>}, {transform_indices = @transform_3, window_bounds = array<i64: 16, 32>}]} {
    %c0 = arith.constant 0 : index
    %c0_0 = arith.constant 0 : index
    %0 = vector.load %arg1[%c0, %c0_0] : memref<16x64xf32, #tpu.memory_space<vmem>>, vector<16x64xf32>
    %c0_1 = arith.constant 0 : index
    %c0_2 = arith.constant 0 : index
    %1 = vector.load %arg2[%c0_1, %c0_2] : memref<64x128xf32, #tpu.memory_space<vmem>>, vector<64x128xf32>
    %cst = arith.constant dense<0.000000e+00> : vector<16x128xf32>
    %2 = tpu.matmul %0, %1, %cst {dimension_numbers = #tpu.dot_dimension_numbers<[1], [0], [0], [1], [0, 0, 1, 1], [], []>} : vector<16x64xf32>, vector<64x128xf32>, vector<16x128xf32> -> vector<16x128xf32>
    %c0_3 = arith.constant 0 : index
    %c0_4 = arith.constant 0 : index
    %3 = vector.load %arg3[%c0_3, %c0_4] : memref<1x128xf32, #tpu.memory_space<vmem>>, vector<1x128xf32>
    %4 = vector.broadcast %3 : vector<1x128xf32> to vector<16x128xf32>
    %5 = arith.addf %2, %4 : vector<16x128xf32>
    %6 = vector.extract_strided_slice %5 {offsets = [0, 0], sizes = [16, 32], strides = [1, 1]} : vector<16x128xf32> to vector<16x32xf32>
    %c0_5 = arith.constant 0 : index
    %c0_6 = arith.constant 0 : index
    %7 = vector.load %arg4[%c0_5, %c0_6] : memref<16x32xf32, #tpu.memory_space<vmem>>, vector<16x32xf32>
    tpu.vector_store %arg4[%c0_5, %c0_6], %6 {strides = array<i32>} : memref<16x32xf32, #tpu.memory_space<vmem>>, vector<16x32xf32>,
    return
  }
  func.func @transform_0(%arg0: i32) -> (i32, i32) {
    %c0_i32 = arith.constant 0 : i32
    %c0_i32_0 = arith.constant 0 : i32
    return %arg0, %c0_i32 : i32, i32
  }
  func.func @transform_1(%arg0: i32) -> (i32, i32) {
    %c0_i32 = arith.constant 0 : i32
    %c0_i32_0 = arith.constant 0 : i32
    %c0_i32_1 = arith.constant 0 : i32
    return %c0_i32, %c0_i32_0 : i32, i32
  }
  func.func @transform_2(%arg0: i32) -> (i32, i32) {
    %c0_i32 = arith.constant 0 : i32
    %c0_i32_0 = arith.constant 0 : i32
    %c0_i32_1 = arith.constant 0 : i32
    return %c0_i32, %c0_i32_0 : i32, i32
  }
  func.func @transform_3(%arg0: i32) -> (i32, i32) {
    %c0_i32 = arith.constant 0 : i32
    %c0_i32_0 = arith.constant 0 : i32
    return %arg0, %c0_i32 : i32, i32
  }
}

</mosaic_0001>

<llo_original>
// kernel: tpu_custom_call.1
$region0: #{tpu_custom_call.1}
  #allocation0 [shape = 'u32[]', space=smem, size = 0x4, offset = 0x4, fixed_abs, tag = 'smem constant byte address 0x4 - core index']
  #allocation1 [shape = 'u32[144,128]{1,0:T(1,128)}', space=vmem, size = 0x12000, scoped, tag = 'internal scratch']
  %s0 = inlined_call_operand.hbm [shape: f32[16,64], index: 0, kind: input, shape index: {}]
  %s1 = inlined_call_operand.hbm [shape: f32[64,128], index: 1, kind: input, shape index: {}]
  %s2 = inlined_call_operand.vmem [shape: f32[1,128], index: 2, kind: input, shape index: {}]
  %s3 = inlined_call_operand.hbm [shape: f32[16,32], index: 3, kind: output, shape index: {}]
  %s4 = sld [smem:[#allocation0]]
  $region30: #{tpu_custom_call.1} parent=0
    _
  %s6 = ssub.s32 1, %s4
  %s7 = scalar_select 0, %s6, %s4
  $region1: #{tpu_custom_call.1} parent=0
    #allocation2 [shape = 'u8[8192]{0}', space=vmem, size = 0x2000, scoped, tag = 'input window, operand 0, single buffered']
    #allocation3 [shape = 's32[1]{0}', space=sflag, size = 0x4, scoped, tag = 'scoped memory for tpu_custom_call.1']
    #allocation4 [shape = 's32[1]{0}', space=sflag, size = 0x4, scoped, tag = 'scoped memory for tpu_custom_call.1']
    #allocation5 [shape = 'u8[32768]{0}', space=vmem, size = 0x8000, scoped, tag = 'input window, operand 1, single buffered']
    #allocation6 [shape = 's32[1]{0}', space=sflag, size = 0x4, scoped, tag = 'scoped memory for tpu_custom_call.1']
    #allocation7 [shape = 'u8[8192]{0}', space=vmem, size = 0x2000, scoped, tag = 'output window, operand 0, single buffered']
    %8 = vsyncpa [#allocation3], 0
    %9 = vsyncpa [#allocation6], 0
    %10 = vsyncpa [#allocation4], 0
    // Predicated region
    $region2: #{tpu_custom_call.1} parent=1 // pred_check
      _
    $region3: #{tpu_custom_call.1} parent=1 // pred_check_branch
      %12 = sbr.rel (0) target = $region5
    $region4: #{tpu_custom_call.1} parent=1 // pred_region
      %s14 = ssub.s32 256, 256
      %15 = vsyncadd [#allocation3], %s14
      %s16 = sshll.u32 [#allocation2], 4
      %s17 = int_to_ptr.vmem [resolvable:$true] %s16
      %22 = dma.hbm_to_vmem [thread:$0]  %s0, 256, %s17, [#allocation3], 128, 128, 8
    $region5: #{tpu_custom_call.1} parent=1 // pred_fallthru
      _
    // Predicated region
    $region6: #{tpu_custom_call.1} parent=1 // pred_check
      _
    $region7: #{tpu_custom_call.1} parent=1 // pred_check_branch
      %24 = sbr.rel (0) target = $region9
    $region8: #{tpu_custom_call.1} parent=1 // pred_region
      %s26 = ssub.s32 1024, 1024
      %27 = vsyncadd [#allocation6], %s26
      %s28 = sshll.u32 [#allocation5], 4
      %s29 = int_to_ptr.vmem [resolvable:$true] %s28
      %34 = dma.hbm_to_vmem [thread:$0]  %s1, 1024, %s29, [#allocation6], 128, 128, 8
    $region9: #{tpu_custom_call.1} parent=1 // pred_fallthru
      _
    // Predicated region
    $region10: #{tpu_custom_call.1} parent=1 // pred_check
      _
    $region11: #{tpu_custom_call.1} parent=1 // pred_check_branch
      %36 = sbr.rel (0) target = $region13
    $region12: #{tpu_custom_call.1} parent=1 // pred_region
      _
    $region13: #{tpu_custom_call.1} parent=1 // pred_fallthru
      _
    // Predicated region
    $region14: #{tpu_custom_call.1} parent=1 // pred_check
      _
    $region15: #{tpu_custom_call.1} parent=1 // pred_check_branch
      %38 = sbr.rel (0) target = $region17
    $region16: #{tpu_custom_call.1} parent=1 // pred_region
      %39 = dma.done [#allocation3], 256
    $region17: #{tpu_custom_call.1} parent=1 // pred_fallthru
      _
    // Predicated region
    $region18: #{tpu_custom_call.1} parent=1 // pred_check
      _
    $region19: #{tpu_custom_call.1} parent=1 // pred_check_branch
      %41 = sbr.rel (0) target = $region21
    $region20: #{tpu_custom_call.1} parent=1 // pred_region
      %42 = dma.done [#allocation6], 1024
    $region21: #{tpu_custom_call.1} parent=1 // pred_fallthru
      _
    %v43 = vld [vmem:[#allocation2] sm:$0xff]
    %v44 = vld [vmem:[#allocation2 + $0x8] sm:$0xff]
    %v45 = vld [vmem:[#allocation5] sm:$0xff]
    %v46 = vld [vmem:[#allocation5 + $0x8] sm:$0xff]
    %v47 = vld [vmem:[#allocation5 + $0x10] sm:$0xff]
    %v48 = vld [vmem:[#allocation5 + $0x18] sm:$0xff]
    %v49 = vld [vmem:[#allocation5 + $0x20] sm:$0xff]
    %v50 = vld [vmem:[#allocation5 + $0x28] sm:$0xff]
    %v51 = vld [vmem:[#allocation5 + $0x30] sm:$0xff]
    %v52 = vld [vmem:[#allocation5 + $0x38] sm:$0xff]
    %v53 = vld [vmem:[%s2] sm:$0x1]
    %v55 = vlaneseq
    %v56 = vshrl.u32 %v55, 7
    %v57 = vsub.s32 0, %v56
    %v58 = vrot.slane %v53, %v57
    %vm60 = vcmask 523264
    %v62 = vsel %vm60, %v43, 0
    %v65 = vsel %vm60, %v44, 0
    %67 = vmatprep.subr.mxu0 0.0
    %68 = vmatpush1.msra.mxu0 %v45
    %69 = vmatprep.subr.mxu0 0.0
    %70 = vmatpush1.msra.mxu0 %v46
    %71 = vmatprep.subr.mxu0 0.0
    %72 = vmatpush1.msra.mxu0 %v47
    %73 = vmatprep.subr.mxu0 0.0
    %74 = vmatpush1.msra.mxu0 %v48
    %75 = vmatprep.subr.mxu0 0.0
    %76 = vmatpush1.msra.mxu0 %v49
    %77 = vmatprep.subr.mxu0 0.0
    %78 = vmatpush1.msra.mxu0 %v50
    %79 = vmatprep.subr.mxu0 0.0
    %80 = vmatpush1.msra.mxu0 %v51
    %81 = vmatprep.subr.mxu0 0.0
    %82 = vmatpush1.msra.mxu0 %v52
    %83 = vmatprep.subr.mxu0 0.0
    %84 = vmatpush1.msra.mxu0 0.0
    %85 = vmatprep.subr.mxu0 0.0
    %86 = vmatpush1.msra.mxu0 0.0
    %87 = vmatprep.subr.mxu0 0.0
    %88 = vmatpush1.msra.mxu0 0.0
    %89 = vmatprep.subr.mxu0 0.0
    %90 = vmatpush1.msra.mxu0 0.0
    %91 = vmatprep.subr.mxu0 0.0
    %92 = vmatpush1.msra.mxu0 0.0
    %93 = vmatprep.subr.mxu0 0.0
    %94 = vmatpush1.msra.mxu0 0.0
    %95 = vmatprep.subr.mxu0 0.0
    %96 = vmatpush1.msra.mxu0 0.0
    %97 = vmatprep.subr.mxu0 0.0
    %98 = vmatpush1.msra.mxu0 0.0
    %99 = vmatprep.subr.mxu0 0.0
    %100 = vmatpush1.msra.mxu0 0.0
    %101 = vmatprep.subr.mxu0 0.0
    %102 = vmatpush1.msra.mxu0 0.0
    %103 = vmatprep.subr.mxu0 0.0
    %104 = vmatpush1.msra.mxu0 0.0
    %105 = vmatprep.subr.mxu0 0.0
    %106 = vmatpush1.msra.mxu0 0.0
    %107 = vmatprep.subr.mxu0 0.0
    %108 = vmatpush1.msra.mxu0 0.0
    %109 = vmatprep.subr.mxu0 0.0
    %110 = vmatpush1.msra.mxu0 0.0
    %111 = vmatprep.subr.mxu0 0.0
    %112 = vmatpush1.msra.mxu0 0.0
    %113 = vmatprep.subr.mxu0 0.0
    %114 = vmatpush1.msra.mxu0 0.0
    %115 = vmatprep.subr.mxu0 0.0
    %116 = vmatpush1.msra.mxu0 0.0
    %117 = vmatprep.subr.mxu0 0.0
    %118 = vmatpush1.msra.mxu0 0.0
    %119 = vmatprep.subr.mxu0 0.0
    %120 = vmatpush1.msra.mxu0 0.0
    %121 = vmatprep.subr.mxu0 0.0
    %122 = vmatpush1.msra.mxu0 0.0
    %123 = vmatprep.subr.mxu0 0.0
    %124 = vmatpush1.msra.mxu0 0.0
    %125 = vmatprep.subr.mxu0 0.0
    %126 = vmatpush1.msra.mxu0 0.0
    %127 = vmatprep.subr.mxu0 0.0
    %128 = vmatpush1.msra.mxu0 0.0
    %129 = vmatprep.subr.mxu0 0.0
    %130 = vmatpush1.msra.mxu0 0.0
    %131 = vmatprep.mubr.f32.mxu0 0.0
    %132 = vmatmul.mubr.f32.gmra.mrb[0].mxu0 %v62
    %v133 = vpop.f32.mrb[0].mxu0
    %v134 = vadd.f32 %v58, %v133
    %v135 = vpop.f32.mrb[0].mxu0
    %136 = vmatprep.mubr.f32.mxu0 0.0
    %137 = vmatmul.mubr.f32.gmra.mrb[0].mxu0 %v65
    %v138 = vpop.f32.mrb[0].mxu0
    %v139 = vadd.f32 %v58, %v138
    %v140 = vpop.f32.mrb[0].mxu0
    %141 = vdwg.mxu0
    %vm142 = vcmask 261120
    %143 = vst.msk [vmem:[#allocation7] sm:$0xff] %vm142, %v134
    %144 = vst.msk [vmem:[#allocation7 + $0x8] sm:$0xff] %vm142, %v139
    // Predicated region
    $region22: #{tpu_custom_call.1} parent=1 // pred_check
      _
    $region23: #{tpu_custom_call.1} parent=1 // pred_check_branch
      %146 = sbr.rel (0) target = $region25
    $region24: #{tpu_custom_call.1} parent=1 // pred_region
      %s148 = ssub.s32 256, 256
      %149 = vsyncadd [#allocation4], %s148
      %s150 = sshll.u32 [#allocation7], 4
      %s151 = int_to_ptr.vmem [resolvable:$true] %s150
      %156 = dma.vmem_to_hbm [thread:$0]  %s151, 256, %s3, [#allocation4], 128, 128, 8
    $region25: #{tpu_custom_call.1} parent=1 // pred_fallthru
      _
    // Predicated region
    $region26: #{tpu_custom_call.1} parent=1 // pred_check
      _
    $region27: #{tpu_custom_call.1} parent=1 // pred_check_branch
      %158 = sbr.rel (0) target = $region29
    $region28: #{tpu_custom_call.1} parent=1 // pred_region
      %159 = dma.done [#allocation4], 256
    $region29: #{tpu_custom_call.1} parent=1 // pred_fallthru
      _
    %160 = vsyncpa [#allocation3], 1
    %161 = vsyncpa [#allocation6], 1
    %162 = vsyncpa [#allocation4], 1

// kernel: tpu_custom_call.1
$region0: #{tpu_custom_call.1}
  #allocation0 [shape = 'u32[]', space=smem, size = 0x4, offset = 0x4, fixed_abs, tag = 'smem constant byte address 0x4 - core index']
  #allocation1 [shape = 'u32[144,128]{1,0:T(1,128)}', space=vmem, size = 0x12000, scoped, tag = 'internal scratch']
  %s0 = inlined_call_operand.hbm [shape: f32[16,64], index: 0, kind: input, shape index: {}]
  %s1 = inlined_call_operand.hbm [shape: f32[64,128], index: 1, kind: input, shape index: {}]
  %s2 = inlined_call_operand.vmem [shape: f32[1,128], index: 2, kind: input, shape index: {}]
  %s3 = inlined_call_operand.hbm [shape: f32[16,32], index: 3, kind: output, shape index: {}]
  %s4 = sld [smem:[#allocation0]]
  $region30: #{tpu_custom_call.1} parent=0
    _
  %s6 = ssub.s32 1, %s4
  %s7 = scalar_select 0, %s6, %s4
  $region1: #{tpu_custom_call.1} parent=0
    #allocation2 [shape = 'u8[8192]{0}', space=vmem, size = 0x2000, scoped, tag = 'input window, operand 0, single buffered']
    #allocation3 [shape = 's32[1]{0}', space=sflag, size = 0x4, scoped, tag = 'scoped memory for tpu_custom_call.1']
    #allocation4 [shape = 's32[1]{0}', space=sflag, size = 0x4, scoped, tag = 'scoped memory for tpu_custom_call.1']
    #allocation5 [shape = 'u8[32768]{0}', space=vmem, size = 0x8000, scoped, tag = 'input window, operand 1, single buffered']
    #allocation6 [shape = 's32[1]{0}', space=sflag, size = 0x4, scoped, tag = 'scoped memory for tpu_custom_call.1']
    #allocation7 [shape = 'u8[8192]{0}', space=vmem, size = 0x2000, scoped, tag = 'output window, operand 0, single buffered']
    %8 = vsyncpa [#allocation3], 0
    %9 = vsyncpa [#allocation6], 0
    %10 = vsyncpa [#allocation4], 0
    // Predicated region
    $region2: #{tpu_custom_call.1} parent=1 // pred_check
      _
    $region3: #{tpu_custom_call.1} parent=1 // pred_check_branch
      %12 = sbr.rel (0) target = $region5
    $region4: #{tpu_custom_call.1} parent=1 // pred_region
      %s14 = ssub.s32 256, 256
      %15 = vsyncadd [#allocation3], %s14
      %s16 = sshll.u32 [#allocation2], 4
      %s17 = int_to_ptr.vmem [resolvable:$true] %s16
      %22 = dma.hbm_to_vmem [thread:$0]  %s0, 256, %s17, [#allocation3], 128, 128, 8
    $region5: #{tpu_custom_call.1} parent=1 // pred_fallthru
      _
    // Predicated region
    $region6: #{tpu_custom_call.1} parent=1 // pred_check
      _
    $region7: #{tpu_custom_call.1} parent=1 // pred_check_branch
      %24 = sbr.rel (0) target = $region9
    $region8: #{tpu_custom_call.1} parent=1 // pred_region
      %s26 = ssub.s32 1024, 1024
      %27 = vsyncadd [#allocation6], %s26
      %s28 = sshll.u32 [#allocation5], 4
      %s29 = int_to_ptr.vmem [resolvable:$true] %s28
      %34 = dma.hbm_to_vmem [thread:$0]  %s1, 1024, %s29, [#allocation6], 128, 128, 8
    $region9: #{tpu_custom_call.1} parent=1 // pred_fallthru
      _
    // Predicated region
    $region10: #{tpu_custom_call.1} parent=1 // pred_check
      _
    $region11: #{tpu_custom_call.1} parent=1 // pred_check_branch
      %36 = sbr.rel (0) target = $region13
    $region12: #{tpu_custom_call.1} parent=1 // pred_region
      _
    $region13: #{tpu_custom_call.1} parent=1 // pred_fallthru
      _
    // Predicated region
    $region14: #{tpu_custom_call.1} parent=1 // pred_check
      _
    $region15: #{tpu_custom_call.1} parent=1 // pred_check_branch
      %38 = sbr.rel (0) target = $region17
    $region16: #{tpu_custom_call.1} parent=1 // pred_region
      %39 = dma.done [#allocation3], 256
    $region17: #{tpu_custom_call.1} parent=1 // pred_fallthru
      _
    // Predicated region
    $region18: #{tpu_custom_call.1} parent=1 // pred_check
      _
    $region19: #{tpu_custom_call.1} parent=1 // pred_check_branch
      %41 = sbr.rel (0) target = $region21
    $region20: #{tpu_custom_call.1} parent=1 // pred_region
      %42 = dma.done [#allocation6], 1024
    $region21: #{tpu_custom_call.1} parent=1 // pred_fallthru
      _
    %v43 = vld [vmem:[#allocation2] sm:$0xff]
    %v44 = vld [vmem:[#allocation2 + $0x8] sm:$0xff]
    %v45 = vld [vmem:[#allocation5] sm:$0xff]
    %v46 = vld [vmem:[#allocation5 + $0x8] sm:$0xff]
    %v47 = vld [vmem:[#allocation5 + $0x10] sm:$0xff]
    %v48 = vld [vmem:[#allocation5 + $0x18] sm:$0xff]
    %v49 = vld [vmem:[#allocation5 + $0x20] sm:$0xff]
    %v50 = vld [vmem:[#allocation5 + $0x28] sm:$0xff]
    %v51 = vld [vmem:[#allocation5 + $0x30] sm:$0xff]
    %v52 = vld [vmem:[#allocation5 + $0x38] sm:$0xff]
    %v53 = vld [vmem:[%s2] sm:$0x1]
    %v55 = vlaneseq
    %v56 = vshrl.u32 %v55, 7
    %v57 = vsub.s32 0, %v56
    %v58 = vrot.slane %v53, %v57
    %vm60 = vcmask 523264
    %v62 = vsel %vm60, %v43, 0
    %v65 = vsel %vm60, %v44, 0
    %67 = vmatprep.subr.mxu0 0.0
    %68 = vmatpush1.msra.mxu0 %v45
    %69 = vmatprep.subr.mxu0 0.0
    %70 = vmatpush1.msra.mxu0 %v46
    %71 = vmatprep.subr.mxu0 0.0
    %72 = vmatpush1.msra.mxu0 %v47
    %73 = vmatprep.subr.mxu0 0.0
    %74 = vmatpush1.msra.mxu0 %v48
    %75 = vmatprep.subr.mxu0 0.0
    %76 = vmatpush1.msra.mxu0 %v49
    %77 = vmatprep.subr.mxu0 0.0
    %78 = vmatpush1.msra.mxu0 %v50
    %79 = vmatprep.subr.mxu0 0.0
    %80 = vmatpush1.msra.mxu0 %v51
    %81 = vmatprep.subr.mxu0 0.0
    %82 = vmatpush1.msra.mxu0 %v52
    %83 = vmatprep.subr.mxu0 0.0
    %84 = vmatpush1.msra.mxu0 0.0
    %85 = vmatprep.subr.mxu0 0.0
    %86 = vmatpush1.msra.mxu0 0.0
    %87 = vmatprep.subr.mxu0 0.0
    %88 = vmatpush1.msra.mxu0 0.0
    %89 = vmatprep.subr.mxu0 0.0
    %90 = vmatpush1.msra.mxu0 0.0
    %91 = vmatprep.subr.mxu0 0.0
    %92 = vmatpush1.msra.mxu0 0.0
    %93 = vmatprep.subr.mxu0 0.0
    %94 = vmatpush1.msra.mxu0 0.0
    %95 = vmatprep.subr.mxu0 0.0
    %96 = vmatpush1.msra.mxu0 0.0
    %97 = vmatprep.subr.mxu0 0.0
    %98 = vmatpush1.msra.mxu0 0.0
    %99 = vmatprep.subr.mxu0 0.0
    %100 = vmatpush1.msra.mxu0 0.0
    %101 = vmatprep.subr.mxu0 0.0
    %102 = vmatpush1.msra.mxu0 0.0
    %103 = vmatprep.subr.mxu0 0.0
    %104 = vmatpush1.msra.mxu0 0.0
    %105 = vmatprep.subr.mxu0 0.0
    %106 = vmatpush1.msra.mxu0 0.0
    %107 = vmatprep.subr.mxu0 0.0
    %108 = vmatpush1.msra.mxu0 0.0
    %109 = vmatprep.subr.mxu0 0.0
    %110 = vmatpush1.msra.mxu0 0.0
    %111 = vmatprep.subr.mxu0 0.0
    %112 = vmatpush1.msra.mxu0 0.0
    %113 = vmatprep.subr.mxu0 0.0
    %114 = vmatpush1.msra.mxu0 0.0
    %115 = vmatprep.subr.mxu0 0.0
    %116 = vmatpush1.msra.mxu0 0.0
    %117 = vmatprep.subr.mxu0 0.0
    %118 = vmatpush1.msra.mxu0 0.0
    %119 = vmatprep.subr.mxu0 0.0
    %120 = vmatpush1.msra.mxu0 0.0
    %121 = vmatprep.subr.mxu0 0.0
    %122 = vmatpush1.msra.mxu0 0.0
    %123 = vmatprep.subr.mxu0 0.0
    %124 = vmatpush1.msra.mxu0 0.0
    %125 = vmatprep.subr.mxu0 0.0
    %126 = vmatpush1.msra.mxu0 0.0
    %127 = vmatprep.subr.mxu0 0.0
    %128 = vmatpush1.msra.mxu0 0.0
    %129 = vmatprep.subr.mxu0 0.0
    %130 = vmatpush1.msra.mxu0 0.0
    %131 = vmatprep.mubr.f32.mxu0 0.0
    %132 = vmatmul.mubr.f32.gmra.mrb[0].mxu0 %v62
    %v133 = vpop.f32.mrb[0].mxu0
    %v134 = vadd.f32 %v58, %v133
    %v135 = vpop.f32.mrb[0].mxu0
    %136 = vmatprep.mubr.f32.mxu0 0.0
    %137 = vmatmul.mubr.f32.gmra.mrb[0].mxu0 %v65
    %v138 = vpop.f32.mrb[0].mxu0
    %v139 = vadd.f32 %v58, %v138
    %v140 = vpop.f32.mrb[0].mxu0
    %141 = vdwg.mxu0
    %vm142 = vcmask 261120
    %143 = vst.msk [vmem:[#allocation7] sm:$0xff] %vm142, %v134
    %144 = vst.msk [vmem:[#allocation7 + $0x8] sm:$0xff] %vm142, %v139
    // Predicated region
    $region22: #{tpu_custom_call.1} parent=1 // pred_check
      _
    $region23: #{tpu_custom_call.1} parent=1 // pred_check_branch
      %146 = sbr.rel (0) target = $region25
    $region24: #{tpu_custom_call.1} parent=1 // pred_region
      %s148 = ssub.s32 256, 256
      %149 = vsyncadd [#allocation4], %s148
      %s150 = sshll.u32 [#allocation7], 4
      %s151 = int_to_ptr.vmem [resolvable:$true] %s150
      %156 = dma.vmem_to_hbm [thread:$0]  %s151, 256, %s3, [#allocation4], 128, 128, 8
    $region25: #{tpu_custom_call.1} parent=1 // pred_fallthru
      _
    // Predicated region
    $region26: #{tpu_custom_call.1} parent=1 // pred_check
      _
    $region27: #{tpu_custom_call.1} parent=1 // pred_check_branch
      %158 = sbr.rel (0) target = $region29
    $region28: #{tpu_custom_call.1} parent=1 // pred_region
      %159 = dma.done [#allocation4], 256
    $region29: #{tpu_custom_call.1} parent=1 // pred_fallthru
      _
    %160 = vsyncpa [#allocation3], 1
    %161 = vsyncpa [#allocation6], 1
    %162 = vsyncpa [#allocation4], 1

</llo_original>
